<compile_context>
chip_gen: v6e
topology: v6e:2x2x1
jax: 0.10.0
libtpu: 0.0.40
codegen_flags: <defaults>
</compile_context>

<pallas_src>
import math

import jax
import jax.numpy as jnp
from jax.experimental import pallas as pl
from jax.experimental.pallas import tpu as pltpu


# ---------------------------------------------------------------------------
# Kernel: fused LayerNorm -> Linear(C,4C) -> ReLU -> Linear(4C,C) on a row tile
# ---------------------------------------------------------------------------

def _transition_kernel(x_ref, w1_ref, b1_ref, w2_ref, b2_ref, o_ref):
    # LayerNorm statistics in f32 (torch default eps = 1e-5).
    x = x_ref[...].astype(jnp.float32)                          # (T, C)
    mu = jnp.mean(x, axis=-1, keepdims=True)
    var = jnp.mean((x - mu) ** 2, axis=-1, keepdims=True)
    xn = (x - mu) * jax.lax.rsqrt(var + 1e-5)
    # (LN affine is folded into w1 / b1 on the host.)

    # Linear(C, 4C) -> ReLU -> Linear(4C, C): bf16 operands, f32 accumulation.
    h = jnp.dot(xn.astype(jnp.bfloat16), w1_ref[...],
                preferred_element_type=jnp.float32) + b1_ref[...]
    h = jnp.maximum(h, 0.0)
    y = jnp.dot(h.astype(jnp.bfloat16), w2_ref[...],
                preferred_element_type=jnp.float32) + b2_ref[...]

    o_ref[...] = y.astype(o_ref.dtype)                          # no residual (matches spec)


# ---------------------------------------------------------------------------
# Wrapper
# ---------------------------------------------------------------------------

def transition(x, p, *, block_rows=1024):
    """x: (..., C).  Flattens leading dims, tiles rows, returns same shape/dtype."""
    orig_shape = x.shape
    C = orig_shape[-1]
    x2d = x.reshape(-1, C)                      # keep native dtype — no f32 upcast copy
    N = x2d.shape[0]
    out_dtype = x.dtype

    # --- host-side param prep: fold LN affine into linear1, bf16 weights ---
    ln_w = p["ln_w"].reshape(-1).astype(jnp.float32)
    ln_b = p["ln_b"].reshape(-1).astype(jnp.float32)
    w1f = p["w1"].astype(jnp.float32)
    w1_folded = (ln_w[:, None] * w1f).astype(jnp.bfloat16)              # (C, H) bf16
    b1_folded = ((ln_b @ w1f) + p["b1"].reshape(-1).astype(jnp.float32))[None, :]  # (1, H) f32
    w2_bf16 = p["w2"].astype(jnp.bfloat16)                              # (H, C) bf16
    b2 = p["b2"].reshape(1, -1).astype(jnp.float32)                     # (1, C) f32
    H = w1_folded.shape[1]

    # --- row tile choice (multiple of 8 sublanes; no HBM pad copy) ---
    if N <= 8:
        tile = N                                 # tiny: single full-extent block
    elif N <= block_rows:
        # Split into >= 2 tiles so the 'parallel' row axis can shard across the
        # two v7x TensorCores (no effect on single-TC v5e/v6e).
        tile = max(8, ((pl.cdiv(N, 2) + 7) // 8) * 8)
    else:
        tile = block_rows

    grid = (pl.cdiv(N, tile),)
    # A partial final block (tile not dividing N) is handled by Pallas boundary
    # masking; rows are independent, so the out-of-range rows never matter.

    out = pl.pallas_call(
        _transition_kernel,
        out_shape=jax.ShapeDtypeStruct((N, C), out_dtype),
        grid=grid,
        in_specs=[
            pl.BlockSpec((tile, C), lambda i: (i, 0)),   # x rows
            pl.BlockSpec((C, H), lambda i: (0, 0)),      # w1 (LN-folded, bf16)
            pl.BlockSpec((1, H), lambda i: (0, 0)),      # b1 (folded, f32)
            pl.BlockSpec((H, C), lambda i: (0, 0)),      # w2 (bf16)
            pl.BlockSpec((1, C), lambda i: (0, 0)),      # b2 (f32)
        ],
        out_specs=pl.BlockSpec((tile, C), lambda i: (i, 0)),
        compiler_params=pltpu.CompilerParams(
            dimension_semantics=("parallel",)),
    )(x2d, w1_folded, b1_folded, w2_bf16, b2)

    return out.reshape(orig_shape)


# ---------------------------------------------------------------------------
# References for correctness checks
# ---------------------------------------------------------------------------

def transition_ref_f32(x, p):
    """Exact PyTorch-semantics reference (all f32)."""
    mu = jnp.mean(x, axis=-1, keepdims=True)
    var = jnp.mean((x - mu) ** 2, axis=-1, keepdims=True)
    xn = (x - mu) * jax.lax.rsqrt(var + 1e-5)
    xn = xn * p["ln_w"][0] + p["ln_b"][0]
    h = jnp.maximum(xn @ p["w1"] + p["b1"][0], 0.0)
    return h @ p["w2"] + p["b2"][0]


def transition_ref_bf16(x, p):
    """Reference that mirrors the kernel's bf16-matmul / folded-affine math."""
    ln_w = p["ln_w"].reshape(-1)
    ln_b = p["ln_b"].reshape(-1)
    w1f = (ln_w[:, None] * p["w1"]).astype(jnp.bfloat16)
    b1f = ln_b @ p["w1"] + p["b1"][0]
    mu = jnp.mean(x, axis=-1, keepdims=True)
    var = jnp.mean((x - mu) ** 2, axis=-1, keepdims=True)
    xn = (x - mu) * jax.lax.rsqrt(var + 1e-5)
    h = jnp.dot(xn.astype(jnp.bfloat16), w1f,
                preferred_element_type=jnp.float32) + b1f
    h = jnp.maximum(h, 0.0)
    return jnp.dot(h.astype(jnp.bfloat16), p["w2"].astype(jnp.bfloat16),
                   preferred_element_type=jnp.float32) + p["b2"][0]


# ---------------------------------------------------------------------------
# Deterministic PyTorch-style init: nn.Linear ~ U(-1/sqrt(fan_in), 1/sqrt(fan_in))
# ---------------------------------------------------------------------------

def _uniform(key, fan_in, shape):
    bound = 1.0 / math.sqrt(fan_in)
    return jax.random.uniform(key, shape, jnp.float32, -bound, bound)


def init_transition_params(key, C, factor=4):
    H = factor * C
    ks = jax.random.split(key, 4)
    return dict(
        ln_w=jnp.ones((1, C), jnp.float32),
        ln_b=jnp.zeros((1, C), jnp.float32),
        w1=_uniform(ks[0], C, (C, H)),
        b1=_uniform(ks[1], C, (1, H)),
        w2=_uniform(ks[2], H, (H, C)),
        b2=_uniform(ks[3], H, (1, C)),
    )


# ---------------------------------------------------------------------------
# Main
# ---------------------------------------------------------------------------

if __name__ == "__main__":
    B, S, C = 2, 64, 128            # embedding_dim=128 (lane-dense), 4C hidden = 512

    key = jax.random.PRNGKey(0)
    k_x, k_p = jax.random.split(key)
    x = jax.random.normal(k_x, (B, S, C), jnp.float32)
    params = init_transition_params(k_p, C, factor=4)

    out = transition(x, params)
    out = jax.block_until_ready(out)

    ref_f32 = transition_ref_f32(x, params)
    ref_bf16 = transition_ref_bf16(x, params)

    assert out.shape == (B, S, C) and out.dtype == jnp.float32
    assert bool(jnp.all(jnp.isfinite(out)))
    # Tight check against a reference doing the same bf16-matmul math ...
    assert bool(jnp.allclose(out, ref_bf16, atol=2e-3, rtol=2e-3))
    # ... and a looser check against the exact f32 PyTorch-semantics reference
    # (bf16 matmul operands introduce ~1e-3-scale drift).
    assert bool(jnp.allclose(out, ref_f32, atol=3e-2, rtol=3e-2))
    print("KERNEL_OK")
</pallas_src>

<mosaic_0001>
module attributes {stable_mosaic.version = 11 : i64} {
  func.func @_transition_kernel(%arg0: i32, %arg1: memref<64x128xf32, #tpu.memory_space<vmem>>, %arg2: memref<128x512xbf16, #tpu.memory_space<vmem>>, %arg3: memref<1x512xf32, #tpu.memory_space<vmem>>, %arg4: memref<512x128xbf16, #tpu.memory_space<vmem>>, %arg5: memref<1x128xf32, #tpu.memory_space<vmem>>, %arg6: memref<64x128xf32, #tpu.memory_space<vmem>>) attributes {dimension_semantics = [#tpu.dimension_semantics<parallel>], iteration_bounds = array<i64: 2>, scalar_prefetch = 0 : i64, scratch_operands = 0 : i64, tpu.core_type = #tpu.core_type<tc>, window_params = [{transform_indices = @transform_0, window_bounds = array<i64: 64, 128>}, {pipeline_mode = #tpu.pipeline_mode<synchronous>, transform_indices = @transform_1, window_bounds = array<i64: 128, 512>}, {pipeline_mode = #tpu.pipeline_mode<synchronous>, transform_indices = @transform_2, window_bounds = array<i64: 1, 512>}, {pipeline_mode = #tpu.pipeline_mode<synchronous>, transform_indices = @transform_3, window_bounds = array<i64: 512, 128>}, {pipeline_mode = #tpu.pipeline_mode<synchronous>, transform_indices = @transform_4, window_bounds = array<i64: 1, 128>}, {transform_indices = @transform_5, window_bounds = array<i64: 64, 128>}]} {
    %c0 = arith.constant 0 : index
    %c0_0 = arith.constant 0 : index
    %0 = vector.load %arg1[%c0, %c0_0] : memref<64x128xf32, #tpu.memory_space<vmem>>, vector<64x128xf32>
    %cst = arith.constant dense<0.000000e+00> : vector<64xf32>
    %1 = vector.multi_reduction <add>, %0, %cst [1] : vector<64x128xf32> to vector<64xf32>
    %2 = vector.shape_cast %1 : vector<64xf32> to vector<64x1xf32>
    %cst_1 = arith.constant 1.280000e+02 : f32
    %3 = vector.broadcast %cst_1 : f32 to vector<64x1xf32>
    %4 = arith.divf %2, %3 : vector<64x1xf32>
    %5 = vector.broadcast %4 : vector<64x1xf32> to vector<64x128xf32>
    %6 = arith.subf %0, %5 : vector<64x128xf32>
    %7 = arith.mulf %6, %6 : vector<64x128xf32>
    %cst_2 = arith.constant dense<0.000000e+00> : vector<64xf32>
    %8 = vector.multi_reduction <add>, %7, %cst_2 [1] : vector<64x128xf32> to vector<64xf32>
    %9 = vector.shape_cast %8 : vector<64xf32> to vector<64x1xf32>
    %cst_3 = arith.constant 1.280000e+02 : f32
    %10 = vector.broadcast %cst_3 : f32 to vector<64x1xf32>
    %11 = arith.divf %9, %10 : vector<64x1xf32>
    %12 = vector.broadcast %4 : vector<64x1xf32> to vector<64x128xf32>
    %13 = arith.subf %0, %12 : vector<64x128xf32>
    %cst_4 = arith.constant 9.99999974E-6 : f32
    %14 = vector.broadcast %cst_4 : f32 to vector<64x1xf32>
    %15 = arith.addf %11, %14 : vector<64x1xf32>
    %16 = math.rsqrt %15 : vector<64x1xf32>
    %17 = vector.broadcast %16 : vector<64x1xf32> to vector<64x128xf32>
    %18 = arith.mulf %13, %17 : vector<64x128xf32>
    %19 = arith.truncf %18 : vector<64x128xf32> to vector<64x128xbf16>
    %c0_5 = arith.constant 0 : index
    %c0_6 = arith.constant 0 : index
    %20 = vector.load %arg2[%c0_5, %c0_6] : memref<128x512xbf16, #tpu.memory_space<vmem>>, vector<128x512xbf16>
    %cst_7 = arith.constant dense<0.000000e+00> : vector<64x512xf32>
    %21 = tpu.matmul %19, %20, %cst_7 {dimension_numbers = #tpu.dot_dimension_numbers<[1], [0], [0], [1], [0, 0, 1, 1], [], []>} : vector<64x128xbf16>, vector<128x512xbf16>, vector<64x512xf32> -> vector<64x512xf32>
    %c0_8 = arith.constant 0 : index
    %c0_9 = arith.constant 0 : index
    %22 = vector.load %arg3[%c0_8, %c0_9] : memref<1x512xf32, #tpu.memory_space<vmem>>, vector<1x512xf32>
    %23 = vector.broadcast %22 : vector<1x512xf32> to vector<64x512xf32>
    %24 = arith.addf %21, %23 : vector<64x512xf32>
    %cst_10 = arith.constant 0.000000e+00 : f32
    %25 = vector.broadcast %cst_10 : f32 to vector<64x512xf32>
    %26 = arith.maximumf %24, %25 : vector<64x512xf32>
    %27 = arith.truncf %26 : vector<64x512xf32> to vector<64x512xbf16>
    %c0_11 = arith.constant 0 : index
    %c0_12 = arith.constant 0 : index
    %28 = vector.load %arg4[%c0_11, %c0_12] : memref<512x128xbf16, #tpu.memory_space<vmem>>, vector<512x128xbf16>
    %cst_13 = arith.constant dense<0.000000e+00> : vector<64x128xf32>
    %29 = tpu.matmul %27, %28, %cst_13 {dimension_numbers = #tpu.dot_dimension_numbers<[1], [0], [0], [1], [0, 0, 1, 1], [], []>} : vector<64x512xbf16>, vector<512x128xbf16>, vector<64x128xf32> -> vector<64x128xf32>
    %c0_14 = arith.constant 0 : index
    %c0_15 = arith.constant 0 : index
    %30 = vector.load %arg5[%c0_14, %c0_15] : memref<1x128xf32, #tpu.memory_space<vmem>>, vector<1x128xf32>
    %31 = vector.broadcast %30 : vector<1x128xf32> to vector<64x128xf32>
    %32 = arith.addf %29, %31 : vector<64x128xf32>
    %c0_16 = arith.constant 0 : index
    %c0_17 = arith.constant 0 : index
    %33 = vector.load %arg6[%c0_16, %c0_17] : memref<64x128xf32, #tpu.memory_space<vmem>>, vector<64x128xf32>
    tpu.vector_store %arg6[%c0_16, %c0_17], %32 {strides = array<i32>} : memref<64x128xf32, #tpu.memory_space<vmem>>, vector<64x128xf32>,
    return
  }
  func.func @transform_0(%arg0: i32) -> (i32, i32) {
    %c0_i32 = arith.constant 0 : i32
    %c0_i32_0 = arith.constant 0 : i32
    return %arg0, %c0_i32 : i32, i32
  }
  func.func @transform_1(%arg0: i32) -> (i32, i32) {
    %c0_i32 = arith.constant 0 : i32
    %c0_i32_0 = arith.constant 0 : i32
    %c0_i32_1 = arith.constant 0 : i32
    return %c0_i32, %c0_i32_0 : i32, i32
  }
  func.func @transform_2(%arg0: i32) -> (i32, i32) {
    %c0_i32 = arith.constant 0 : i32
    %c0_i32_0 = arith.constant 0 : i32
    %c0_i32_1 = arith.constant 0 : i32
    return %c0_i32, %c0_i32_0 : i32, i32
  }
  func.func @transform_3(%arg0: i32) -> (i32, i32) {
    %c0_i32 = arith.constant 0 : i32
    %c0_i32_0 = arith.constant 0 : i32
    %c0_i32_1 = arith.constant 0 : i32
    return %c0_i32, %c0_i32_0 : i32, i32
  }
  func.func @transform_4(%arg0: i32) -> (i32, i32) {
    %c0_i32 = arith.constant 0 : i32
    %c0_i32_0 = arith.constant 0 : i32
    %c0_i32_1 = arith.constant 0 : i32
    return %c0_i32, %c0_i32_0 : i32, i32
  }
  func.func @transform_5(%arg0: i32) -> (i32, i32) {
    %c0_i32 = arith.constant 0 : i32
    %c0_i32_0 = arith.constant 0 : i32
    return %arg0, %c0_i32 : i32, i32
  }
}

</mosaic_0001>

<llo_original>
// kernel: tpu_custom_call.1
$region0: #{tpu_custom_call.1}
  #allocation0 [shape = 'u32[]', space=smem, size = 0x4, offset = 0x4, fixed_abs, tag = 'smem constant byte address 0x4 - core index']
  #allocation1 [shape = 'u32[144,128]{1,0:T(1,128)}', space=vmem, size = 0x12000, scoped, tag = 'internal scratch']
  %s0 = inlined_call_operand.hbm [shape: f32[128,128], index: 0, kind: input, shape index: {}]
  %s1 = inlined_call_operand.hbm [shape: bf16[128,512], index: 1, kind: input, shape index: {}]
  %s2 = inlined_call_operand.hbm [shape: f32[1,512], index: 2, kind: input, shape index: {}]
  %s3 = inlined_call_operand.hbm [shape: bf16[512,128], index: 3, kind: input, shape index: {}]
  %s4 = inlined_call_operand.vmem [shape: f32[1,128], index: 4, kind: input, shape index: {}]
  %s5 = inlined_call_operand.hbm [shape: f32[128,128], index: 5, kind: output, shape index: {}]
  %s6 = sld [smem:[#allocation0]]
  $region69: #{tpu_custom_call.1} parent=0
    _
  %s8 = ssub.s32 1, %s6
  %s9 = scalar_select 0, %s8, %s6
  $region1: #{tpu_custom_call.1} parent=0
    #allocation2 [shape = 'u8[65536]{0}', space=vmem, size = 0x10000, scoped, tag = 'input window, operand 0']
    #allocation3 [shape = 's32[2]{0}', space=sflag, size = 0x8, scoped, tag = 'scoped memory for tpu_custom_call.1']
    #allocation4 [shape = 's32[2]{0}', space=sflag, size = 0x8, scoped, tag = 'scoped memory for tpu_custom_call.1']
    #allocation5 [shape = 'u8[131072]{0}', space=vmem, size = 0x20000, scoped, tag = 'input window, operand 1, single buffered']
    #allocation6 [shape = 's32[1]{0}', space=sflag, size = 0x4, scoped, tag = 'scoped memory for tpu_custom_call.1']
    #allocation7 [shape = 'u8[2048]{0}', space=vmem, size = 0x800, scoped, tag = 'input window, operand 2, single buffered']
    #allocation8 [shape = 'u8[131072]{0}', space=vmem, size = 0x20000, scoped, tag = 'input window, operand 3, single buffered']
    #allocation9 [shape = 's32[1]{0}', space=sflag, size = 0x4, scoped, tag = 'scoped memory for tpu_custom_call.1']
    #allocation10 [shape = 'u8[65536]{0}', space=vmem, size = 0x10000, scoped, tag = 'output window, operand 0']
    %10 = vsyncpa [#allocation3], 0
    %s11 = scalar_lea.sflag [#allocation3], 1
    %12 = vsyncpa %s11, 0
    %13 = vsyncpa [#allocation6], 0
    %14 = vsyncpa [#allocation9], 0
    %15 = vsyncpa [#allocation4], 0
    %s16 = scalar_lea.sflag [#allocation4], 1
    %17 = vsyncpa %s16, 0
    loop: start=0, step=1, limit=4
    $region2: #{tpu_custom_call.1} parent=1 // loop_pre_header
      _
    $region3: #{tpu_custom_call.1} parent=1 // loop_header
      %s19 = sphi 0, %s23
      %p20 = scmp.ge.s32.totalorder %s19, 4
      %s29 = sphi 0, %s31
      %s32 = sphi 0, %s29
      %s33 = sphi 0, %s32
      %s49 = sphi 0, %s33
      %s53 = sphi 0, %s53
      %s55 = sphi 0, %s53
      %s56 = sphi 0, %s55
      %s70 = sphi 0, %s56
      %s74 = sphi 0, %s74
      %s76 = sphi 0, %s74
      %s77 = sphi 0, %s76
      %s91 = sphi 0, %s77
      %s95 = sphi 0, %s95
      %s97 = sphi 0, %s95
      %s98 = sphi 0, %s97
      %s112 = sphi 0, %s98
      %s116 = sphi 0, %s116
      %s118 = sphi 0, %s116
      %s119 = sphi 0, %s118
      %s133 = sphi 0, %s119
      %s139 = sphi 0, %s141
      %s142 = sphi 0, %s139
      %s143 = sphi 0, %s142
      %s159 = sphi 0, %s143
    $region4: #{tpu_custom_call.1} parent=1 // loop_header_branch
      %22 = sbr.rel (%p20) target = $region8
    $region5: #{tpu_custom_call.1} parent=1 // loop_body
      %s24 = ssub.s32 %s19, 1
      %s25 = ssub.s32 %s19, 2
      %s26 = sadd.s32 %s19, 1
      %s27 = ssub.s32 %s19, %s26
      %p28 = scmp.eq.s32.totalorder %s27, 0
      %s30 = sadd.s32 %s29, 1
      %s31 = scalar_select %p28, %s29, %s30
      %p34 = pneg %p28
      %p35 = scmp.eq.s32.totalorder %s19, 1
      %p36 = por %p34, %p35
      %p37 = scmp.ne.s32.totalorder %s29, %s32
      %p38 = scmp.eq.s32.totalorder %s19, 0
      %p39 = por %p37, %p38
      %p40 = scmp.ne.s32.totalorder %s29, %s32
      %p41 = scmp.eq.s32.totalorder %s24, 1
      %p42 = por %p40, %p41
      %p43 = scmp.ne.s32.totalorder %s32, %s33
      %p44 = scmp.eq.s32.totalorder %s24, 0
      %p45 = por %p43, %p44
      %p46 = scmp.ne.s32.totalorder %s32, %s33
      %p47 = scmp.eq.s32.totalorder %s25, 1
      %p48 = por %p46, %p47
      %p50 = scmp.ne.s32.totalorder %s33, %s49
      %p51 = scmp.eq.s32.totalorder %s25, 0
      %p52 = por %p50, %p51
      %s54 = sadd.s32 %s53, 1
      %p57 = scmp.eq.s32.totalorder %s19, 1
      %p58 = scmp.ne.s32.totalorder %s53, %s55
      %p59 = scmp.eq.s32.totalorder %s19, 0
      %p60 = por %p58, %p59
      %p61 = scmp.ne.s32.totalorder %s53, %s55
      %p62 = scmp.eq.s32.totalorder %s24, 1
      %p63 = por %p61, %p62
      %p64 = scmp.ne.s32.totalorder %s55, %s56
      %p65 = scmp.eq.s32.totalorder %s24, 0
      %p66 = por %p64, %p65
      %p67 = scmp.ne.s32.totalorder %s55, %s56
      %p68 = scmp.eq.s32.totalorder %s25, 1
      %p69 = por %p67, %p68
      %p71 = scmp.ne.s32.totalorder %s56, %s70
      %p72 = scmp.eq.s32.totalorder %s25, 0
      %p73 = por %p71, %p72
      %s75 = sadd.s32 %s74, 1
      %p78 = scmp.eq.s32.totalorder %s19, 1
      %p79 = scmp.ne.s32.totalorder %s74, %s76
      %p80 = scmp.eq.s32.totalorder %s19, 0
      %p81 = por %p79, %p80
      %p82 = scmp.ne.s32.totalorder %s74, %s76
      %p83 = scmp.eq.s32.totalorder %s24, 1
      %p84 = por %p82, %p83
      %p85 = scmp.ne.s32.totalorder %s76, %s77
      %p86 = scmp.eq.s32.totalorder %s24, 0
      %p87 = por %p85, %p86
      %p88 = scmp.ne.s32.totalorder %s76, %s77
      %p89 = scmp.eq.s32.totalorder %s25, 1
      %p90 = por %p88, %p89
      %p92 = scmp.ne.s32.totalorder %s77, %s91
      %p93 = scmp.eq.s32.totalorder %s25, 0
      %p94 = por %p92, %p93
      %s96 = sadd.s32 %s95, 1
      %p99 = scmp.eq.s32.totalorder %s19, 1
      %p100 = scmp.ne.s32.totalorder %s95, %s97
      %p101 = scmp.eq.s32.totalorder %s19, 0
      %p102 = por %p100, %p101
      %p103 = scmp.ne.s32.totalorder %s95, %s97
      %p104 = scmp.eq.s32.totalorder %s24, 1
      %p105 = por %p103, %p104
      %p106 = scmp.ne.s32.totalorder %s97, %s98
      %p107 = scmp.eq.s32.totalorder %s24, 0
      %p108 = por %p106, %p107
      %p109 = scmp.ne.s32.totalorder %s97, %s98
      %p110 = scmp.eq.s32.totalorder %s25, 1
      %p111 = por %p109, %p110
      %p113 = scmp.ne.s32.totalorder %s98, %s112
      %p114 = scmp.eq.s32.totalorder %s25, 0
      %p115 = por %p113, %p114
      %s117 = sadd.s32 %s116, 1
      %p120 = scmp.eq.s32.totalorder %s19, 1
      %p121 = scmp.ne.s32.totalorder %s116, %s118
      %p122 = scmp.eq.s32.totalorder %s19, 0
      %p123 = por %p121, %p122
      %p124 = scmp.ne.s32.totalorder %s116, %s118
      %p125 = scmp.eq.s32.totalorder %s24, 1
      %p126 = por %p124, %p125
      %p127 = scmp.ne.s32.totalorder %s118, %s119
      %p128 = scmp.eq.s32.totalorder %s24, 0
      %p129 = por %p127, %p128
      %p130 = scmp.ne.s32.totalorder %s118, %s119
      %p131 = scmp.eq.s32.totalorder %s25, 1
      %p132 = por %p130, %p131
      %p134 = scmp.ne.s32.totalorder %s119, %s133
      %p135 = scmp.eq.s32.totalorder %s25, 0
      %p136 = por %p134, %p135
      %s137 = ssub.s32 %s19, %s26
      %p138 = scmp.eq.s32.totalorder %s137, 0
      %s140 = sadd.s32 %s139, 1
      %s141 = scalar_select %p138, %s139, %s140
      %p144 = pneg %p138
      %p145 = scmp.eq.s32.totalorder %s19, 1
      %p146 = por %p144, %p145
      %p147 = scmp.ne.s32.totalorder %s139, %s142
      %p148 = scmp.eq.s32.totalorder %s19, 0
      %p149 = por %p147, %p148
      %p150 = scmp.ne.s32.totalorder %s139, %s142
      %p151 = scmp.eq.s32.totalorder %s24, 1
      %p152 = por %p150, %p151
      %p153 = scmp.ne.s32.totalorder %s142, %s143
      %p154 = scmp.eq.s32.totalorder %s24, 0
      %p155 = por %p153, %p154
      %p156 = scmp.ne.s32.totalorder %s142, %s143
      %p157 = scmp.eq.s32.totalorder %s25, 1
      %p158 = por %p156, %p157
      %p160 = scmp.ne.s32.totalorder %s143, %s159
      %p161 = scmp.eq.s32.totalorder %s25, 0
      %p162 = por %p160, %p161
      %p163 = scmp.le.s32.totalorder 1, %s19
      %p164 = scmp.lt.s32.totalorder %s19, 3
      %p165 = pnand %p163, %p164
      %p166 = pneg %p165
      // Predicated region
      $region9: #{tpu_custom_call.1} parent=5 // pred_check
        _
      $region10: #{tpu_custom_call.1} parent=5 // pred_check_branch
        %168 = sbr.rel (%p165) target = $region12
      $region11: #{tpu_custom_call.1} parent=5 // pred_region
        %s169 = ssub.s32 %s19, 1
        // Predicated region
        $region13: #{tpu_custom_call.1} parent=11 // pred_check
          %p170 = pneg %p66
        $region14: #{tpu_custom_call.1} parent=11 // pred_check_branch
          %172 = sbr.rel (%p170) target = $region16
        $region15: #{tpu_custom_call.1} parent=11 // pred_region
          %s174 = ssub.s32 4096, 4096
          %175 = vsyncadd [#allocation6], %s174
          %s176 = sshll.u32 [#allocation5], 4
          %s177 = int_to_ptr.vmem [resolvable:$true] %s176
          %182 = dma.hbm_to_vmem [thread:$0]  %s1, 4096, %s177, [#allocation6], 256, 256, 16
        $region16: #{tpu_custom_call.1} parent=11 // pred_fallthru
          _
        // Predicated region
        $region17: #{tpu_custom_call.1} parent=11 // pred_check
          %p183 = pneg %p87
        $region18: #{tpu_custom_call.1} parent=11 // pred_check_branch
          %185 = sbr.rel (%p183) target = $region20
        $region19: #{tpu_custom_call.1} parent=11 // pred_region
          %s187 = ssub.s32 64, 64
          %188 = vsyncadd [#allocation6], %s187
          %s190 = sshll.u32 [#allocation7], 4
          %s191 = int_to_ptr.vmem [resolvable:$true] %s190
          %193 = dma.hbm_to_vmem [thread:$0]  %s2, 64, %s191, [#allocation6]
        $region20: #{tpu_custom_call.1} parent=11 // pred_fallthru
          _
        // Predicated region
        $region21: #{tpu_custom_call.1} parent=11 // pred_check
          %p194 = pneg %p108
        $region22: #{tpu_custom_call.1} parent=11 // pred_check_branch
          %196 = sbr.rel (%p194) target = $region24
        $region23: #{tpu_custom_call.1} parent=11 // pred_region
          %s198 = ssub.s32 4096, 4096
          %199 = vsyncadd [#allocation9], %s198
          %s200 = sshll.u32 [#allocation8], 4
          %s201 = int_to_ptr.vmem [resolvable:$true] %s200
          %206 = dma.hbm_to_vmem [thread:$0]  %s3, 4096, %s201, [#allocation9], 64, 64, 4
        $region24: #{tpu_custom_call.1} parent=11 // pred_fallthru
          _
        // Predicated region
        $region25: #{tpu_custom_call.1} parent=11 // pred_check
          %p207 = pneg %p129
        $region26: #{tpu_custom_call.1} parent=11 // pred_check_branch
          %209 = sbr.rel (%p207) target = $region28
        $region27: #{tpu_custom_call.1} parent=11 // pred_region
          _
        $region28: #{tpu_custom_call.1} parent=11 // pred_fallthru
          _
      $region12: #{tpu_custom_call.1} parent=5 // pred_fallthru
        _
      %p210 = scmp.lt.s32.totalorder %s19, 2
      // Predicated region
      $region29: #{tpu_custom_call.1} parent=5 // pred_check
        %p211 = pneg %p210
      $region30: #{tpu_custom_call.1} parent=5 // pred_check_branch
        %213 = sbr.rel (%p211) target = $region32
      $region31: #{tpu_custom_call.1} parent=5 // pred_region
        // Predicated region
        $region33: #{tpu_custom_call.1} parent=31 // pred_check
          %p214 = pneg %p39
        $region34: #{tpu_custom_call.1} parent=31 // pred_check_branch
          %216 = sbr.rel (%p214) target = $region36
        $region35: #{tpu_custom_call.1} parent=31 // pred_region
          %s217 = sand.u32 %s29, 1
          %s218 = scalar_lea.sflag [#allocation3], %s217
          %s219 = sand.u32 %s29, 1
          %s220 = smul.addr %s219, 64
          %s221 = scalar_lea.vmem [#allocation2], %s220
          %s222 = smul.u32 8, %s19
          %s224 = ssub.s32 1024, 1024
          %225 = vsyncadd %s218, %s224
          %s226 = smul.addr %s222, 128
          %s227 = scalar_lea.hbm %s0, %s226
          %s228 = sshll.u32 %s221, 4
          %s229 = int_to_ptr.vmem [resolvable:$true] %s228
          %234 = dma.hbm_to_vmem [thread:$0]  %s227, 1024, %s229, %s218, 128, 128, 8
        $region36: #{tpu_custom_call.1} parent=31 // pred_fallthru
          _
      $region32: #{tpu_custom_call.1} parent=5 // pred_fallthru
        _
      %p235 = scmp.le.s32.totalorder 1, %s19
      %p236 = scmp.lt.s32.totalorder %s19, 3
      %p237 = pnand %p235, %p236
      %p238 = pneg %p237
      // Predicated region
      $region37: #{tpu_custom_call.1} parent=5 // pred_check
        _
      $region38: #{tpu_custom_call.1} parent=5 // pred_check_branch
        %240 = sbr.rel (%p237) target = $region40
      $region39: #{tpu_custom_call.1} parent=5 // pred_region
        %s241 = ssub.s32 %s19, 1
        %s242 = sand.u32 %s32, 1
        %s243 = scalar_lea.sflag [#allocation3], %s242
        %s244 = sand.u32 %s32, 1
        %s245 = smul.addr %s244, 64
        %s246 = scalar_lea.vmem [#allocation2], %s245
        // Predicated region
        $region41: #{tpu_custom_call.1} parent=39 // pred_check
          %p247 = pneg %p45
        $region42: #{tpu_custom_call.1} parent=39 // pred_check_branch
          %249 = sbr.rel (%p247) target = $region44
        $region43: #{tpu_custom_call.1} parent=39 // pred_region
          %250 = dma.done %s243, 1024
        $region44: #{tpu_custom_call.1} parent=39 // pred_fallthru
          _
        // Predicated region
        $region45: #{tpu_custom_call.1} parent=39 // pred_check
          %p251 = pneg %p66
        $region46: #{tpu_custom_call.1} parent=39 // pred_check_branch
          %253 = sbr.rel (%p251) target = $region48
        $region47: #{tpu_custom_call.1} parent=39 // pred_region
          %254 = dma.done [#allocation6], 4096
        $region48: #{tpu_custom_call.1} parent=39 // pred_fallthru
          _
        // Predicated region
        $region49: #{tpu_custom_call.1} parent=39 // pred_check
          %p255 = pneg %p87
        $region50: #{tpu_custom_call.1} parent=39 // pred_check_branch
          %257 = sbr.rel (%p255) target = $region52
        $region51: #{tpu_custom_call.1} parent=39 // pred_region
          %258 = dma.done [#allocation6], 64
        $region52: #{tpu_custom_call.1} parent=39 // pred_fallthru
          _
        // Predicated region
        $region53: #{tpu_custom_call.1} parent=39 // pred_check
          %p259 = pneg %p108
        $region54: #{tpu_custom_call.1} parent=39 // pred_check_branch
          %261 = sbr.rel (%p259) target = $region56
        $region55: #{tpu_custom_call.1} parent=39 // pred_region
          %262 = dma.done [#allocation9], 4096
        $region56: #{tpu_custom_call.1} parent=39 // pred_fallthru
          _
        %s263 = sand.u32 %s32, 1
        %s264 = scalar_lea.sflag [#allocation3], %s263
        %s265 = sand.u32 %s32, 1
        %s266 = smul.addr %s265, 64
        %s267 = scalar_lea.vmem [#allocation2], %s266
        %p268 = pneg %p45
        %p269 = pneg %p42
        %p270 = pneg %p66
        %p271 = pneg %p63
        %p272 = pneg %p87
        %p273 = pneg %p84
        %p274 = pneg %p108
        %p275 = pneg %p105
        %p276 = pneg %p129
        %p277 = pneg %p126
        %p278 = pneg %p155
        %p279 = pneg %p152
        %s280 = sand.u32 %s142, 1
        %s281 = scalar_lea.sflag [#allocation4], %s280
        %s282 = sand.u32 %s142, 1
        %s283 = smul.addr %s282, 64
        %s284 = scalar_lea.vmem [#allocation10], %s283
        %s285 = smul.u32 8, %s24
        %s286 = smul.u32 8, %s24
        %v288 = vld [vmem:[%s246] sm:$0xff]
        %v289 = vld [vmem:[%s246 + $0x8] sm:$0xff]
        %v290 = vld [vmem:[%s246 + $0x10] sm:$0xff]
        %v291 = vld [vmem:[%s246 + $0x18] sm:$0xff]
        %v292 = vld [vmem:[%s246 + $0x20] sm:$0xff]
        %v293 = vld [vmem:[%s246 + $0x28] sm:$0xff]
        %v294 = vld [vmem:[%s246 + $0x30] sm:$0xff]
        %v295 = vld [vmem:[%s246 + $0x38] sm:$0xff]
        %296 = vadd.xlane.f32.xlu0 %v288
        %v297 = vpop.xlane.xlu0 %296
        %298 = vadd.xlane.f32.xlu0 %v289
        %v299 = vpop.xlane.xlu0 %298
        %300 = vadd.xlane.f32.xlu0 %v290
        %v301 = vpop.xlane.xlu0 %300
        %302 = vadd.xlane.f32.xlu0 %v291
        %v303 = vpop.xlane.xlu0 %302
        %304 = vadd.xlane.f32.xlu0 %v292
        %v305 = vpop.xlane.xlu0 %304
        %306 = vadd.xlane.f32.xlu0 %v293
        %v307 = vpop.xlane.xlu0 %306
        %308 = vadd.xlane.f32.xlu0 %v294
        %v309 = vpop.xlane.xlu0 %308
        %310 = vadd.xlane.f32.xlu0 %v295
        %v311 = vpop.xlane.xlu0 %310
        %v312 = vrcp.pop 128.0
        %v313 = vmul.f32 %v297, %v312
        %v314 = vmul.f32 %v299, %v312
        %v315 = vmul.f32 %v301, %v312
        %v316 = vmul.f32 %v303, %v312
        %v317 = vmul.f32 %v305, %v312
        %v318 = vmul.f32 %v307, %v312
        %v319 = vmul.f32 %v309, %v312
        %v320 = vmul.f32 %v311, %v312
        %v321 = vsub.f32 %v288, %v313
        %v322 = vsub.f32 %v289, %v314
        %v323 = vsub.f32 %v290, %v315
        %v324 = vsub.f32 %v291, %v316
        %v325 = vsub.f32 %v292, %v317
        %v326 = vsub.f32 %v293, %v318
        %v327 = vsub.f32 %v294, %v319
        %v328 = vsub.f32 %v295, %v320
        %v329 = vmul.f32 %v321, %v321
        %v330 = vmul.f32 %v322, %v322
        %v331 = vmul.f32 %v323, %v323
        %v332 = vmul.f32 %v324, %v324
        %v333 = vmul.f32 %v325, %v325
        %v334 = vmul.f32 %v326, %v326
        %v335 = vmul.f32 %v327, %v327
        %v336 = vmul.f32 %v328, %v328
        %337 = vadd.xlane.f32.xlu0 %v329
        %v338 = vpop.xlane.xlu0 %337
        %339 = vadd.xlane.f32.xlu0 %v330
        %v340 = vpop.xlane.xlu0 %339
        %341 = vadd.xlane.f32.xlu0 %v331
        %v342 = vpop.xlane.xlu0 %341
        %343 = vadd.xlane.f32.xlu0 %v332
        %v344 = vpop.xlane.xlu0 %343
        %345 = vadd.xlane.f32.xlu0 %v333
        %v346 = vpop.xlane.xlu0 %345
        %347 = vadd.xlane.f32.xlu0 %v334
        %v348 = vpop.xlane.xlu0 %347
        %349 = vadd.xlane.f32.xlu0 %v335
        %v350 = vpop.xlane.xlu0 %349
        %351 = vadd.xlane.f32.xlu0 %v336
        %v352 = vpop.xlane.xlu0 %351
        %v353 = vmul.f32 %v338, %v312
        %v354 = vmul.f32 %v340, %v312
        %v355 = vmul.f32 %v342, %v312
        %v356 = vmul.f32 %v344, %v312
        %v357 = vmul.f32 %v346, %v312
        %v358 = vmul.f32 %v348, %v312
        %v359 = vmul.f32 %v350, %v312
        %v360 = vmul.f32 %v352, %v312
        %v361 = vadd.f32 %v353, 1e-05
        %v362 = vadd.f32 %v354, 1e-05
        %v363 = vadd.f32 %v355, 1e-05
        %v364 = vadd.f32 %v356, 1e-05
        %v365 = vadd.f32 %v357, 1e-05
        %v366 = vadd.f32 %v358, 1e-05
        %v367 = vadd.f32 %v359, 1e-05
        %v368 = vadd.f32 %v360, 1e-05
        %v369 = vrsqrt.pop %v361
        %v370 = vrsqrt.pop %v362
        %v371 = vrsqrt.pop %v363
        %v372 = vrsqrt.pop %v364
        %v373 = vrsqrt.pop %v365
        %v374 = vrsqrt.pop %v366
        %v375 = vrsqrt.pop %v367
        %v376 = vrsqrt.pop %v368
        %v377 = vmul.f32 %v321, %v369
        %v378 = vmul.f32 %v322, %v370
        %v379 = vmul.f32 %v323, %v371
        %v380 = vmul.f32 %v324, %v372
        %v381 = vmul.f32 %v325, %v373
        %v382 = vmul.f32 %v326, %v374
        %v383 = vmul.f32 %v327, %v375
        %v384 = vmul.f32 %v328, %v376
        %v385 = vpack.c.bf16 %v378, %v377
        %v386 = vpack.c.bf16 %v380, %v379
        %v387 = vpack.c.bf16 %v382, %v381
        %v388 = vpack.c.bf16 %v384, %v383
        %v389 = vld [vmem:[#allocation5] sm:$0xff]
        %v390 = vld [vmem:[#allocation5 + $0x8] sm:$0xff]
        %v391 = vld [vmem:[#allocation5 + $0x10] sm:$0xff]
        %v392 = vld [vmem:[#allocation5 + $0x18] sm:$0xff]
        %v393 = vld [vmem:[#allocation5 + $0x20] sm:$0xff]
        %v394 = vld [vmem:[#allocation5 + $0x28] sm:$0xff]
        %v395 = vld [vmem:[#allocation5 + $0x30] sm:$0xff]
        %v396 = vld [vmem:[#allocation5 + $0x38] sm:$0xff]
        %v397 = vld [vmem:[#allocation5 + $0x40] sm:$0xff]
        %v398 = vld [vmem:[#allocation5 + $0x48] sm:$0xff]
        %v399 = vld [vmem:[#allocation5 + $0x50] sm:$0xff]
        %v400 = vld [vmem:[#allocation5 + $0x58] sm:$0xff]
        %v401 = vld [vmem:[#allocation5 + $0x60] sm:$0xff]
        %v402 = vld [vmem:[#allocation5 + $0x68] sm:$0xff]
        %v403 = vld [vmem:[#allocation5 + $0x70] sm:$0xff]
        %v404 = vld [vmem:[#allocation5 + $0x78] sm:$0xff]
        %v405 = vld [vmem:[#allocation5 + $0x80] sm:$0xff]
        %v406 = vld [vmem:[#allocation5 + $0x88] sm:$0xff]
        %v407 = vld [vmem:[#allocation5 + $0x90] sm:$0xff]
        %v408 = vld [vmem:[#allocation5 + $0x98] sm:$0xff]
        %v409 = vld [vmem:[#allocation5 + $0xa0] sm:$0xff]
        %v410 = vld [vmem:[#allocation5 + $0xa8] sm:$0xff]
        %v411 = vld [vmem:[#allocation5 + $0xb0] sm:$0xff]
        %v412 = vld [vmem:[#allocation5 + $0xb8] sm:$0xff]
        %v413 = vld [vmem:[#allocation5 + $0xc0] sm:$0xff]
        %v414 = vld [vmem:[#allocation5 + $0xc8] sm:$0xff]
        %v415 = vld [vmem:[#allocation5 + $0xd0] sm:$0xff]
        %v416 = vld [vmem:[#allocation5 + $0xd8] sm:$0xff]
        %v417 = vld [vmem:[#allocation5 + $0xe0] sm:$0xff]
        %v418 = vld [vmem:[#allocation5 + $0xe8] sm:$0xff]
        %v419 = vld [vmem:[#allocation5 + $0xf0] sm:$0xff]
        %v420 = vld [vmem:[#allocation5 + $0xf8] sm:$0xff]
        %v421 = vld [vmem:[#allocation7] sm:$0xf]
        %v423 = vlaneseq
        %v424 = vshrl.u32 %v423, 7
        %v425 = vsub.s32 0, %v424
        %v426 = vrot.slane %v421, %v425
        %v427 = vlaneseq
        %v428 = vshrl.u32 %v427, 7
        %v429 = vsub.s32 1, %v428
        %v430 = vrot.slane %v421, %v429
        %v431 = vlaneseq
        %v432 = vshrl.u32 %v431, 7
        %v433 = vsub.s32 2, %v432
        %v434 = vrot.slane %v421, %v433
        %v435 = vlaneseq
        %v436 = vshrl.u32 %v435, 7
        %v437 = vsub.s32 3, %v436
        %v438 = vrot.slane %v421, %v437
        %v475 = vunpack.c.l.b16 %v389
        %v476 = vunpack.c.h.b16 %v389
        %v477 = vunpack.c.l.b16 %v390
        %v478 = vunpack.c.h.b16 %v390
        %v479 = vunpack.c.l.b16 %v391
        %v480 = vunpack.c.h.b16 %v391
        %v481 = vunpack.c.l.b16 %v392
        %v482 = vunpack.c.h.b16 %v392
        %v483 = vunpack.c.l.b16 %v393
        %v484 = vunpack.c.h.b16 %v393
        %v485 = vunpack.c.l.b16 %v394
        %v486 = vunpack.c.h.b16 %v394
        %v487 = vunpack.c.l.b16 %v395
        %v488 = vunpack.c.h.b16 %v395
        %v489 = vunpack.c.l.b16 %v396
        %v490 = vunpack.c.h.b16 %v396
        %v491 = vunpack.c.l.b16 %v397
        %v492 = vunpack.c.h.b16 %v397
        %v493 = vunpack.c.l.b16 %v398
        %v494 = vunpack.c.h.b16 %v398
        %v495 = vunpack.c.l.b16 %v399
        %v496 = vunpack.c.h.b16 %v399
        %v497 = vunpack.c.l.b16 %v400
        %v498 = vunpack.c.h.b16 %v400
        %v499 = vunpack.c.l.b16 %v401
        %v500 = vunpack.c.h.b16 %v401
        %v501 = vunpack.c.l.b16 %v402
        %v502 = vunpack.c.h.b16 %v402
        %v503 = vunpack.c.l.b16 %v403
        %v504 = vunpack.c.h.b16 %v403
        %v505 = vunpack.c.l.b16 %v404
        %v506 = vunpack.c.h.b16 %v404
        %v507 = vunpack.c.l.b16 %v405
        %v508 = vunpack.c.h.b16 %v405
        %v509 = vunpack.c.l.b16 %v406
        %v510 = vunpack.c.h.b16 %v406
        %v511 = vunpack.c.l.b16 %v407
        %v512 = vunpack.c.h.b16 %v407
        %v513 = vunpack.c.l.b16 %v408
        %v514 = vunpack.c.h.b16 %v408
        %v515 = vunpack.c.l.b16 %v409
        %v516 = vunpack.c.h.b16 %v409
        %v517 = vunpack.c.l.b16 %v410
        %v518 = vunpack.c.h.b16 %v410
        %v519 = vunpack.c.l.b16 %v411
        %v520 = vunpack.c.h.b16 %v411
        %v521 = vunpack.c.l.b16 %v412
        %v522 = vunpack.c.h.b16 %v412
        %v523 = vunpack.c.l.b16 %v413
        %v524 = vunpack.c.h.b16 %v413
        %v525 = vunpack.c.l.b16 %v414
        %v526 = vunpack.c.h.b16 %v414
        %v527 = vunpack.c.l.b16 %v415
        %v528 = vunpack.c.h.b16 %v415
        %v529 = vunpack.c.l.b16 %v416
        %v530 = vunpack.c.h.b16 %v416
        %v531 = vunpack.c.l.b16 %v417
        %v532 = vunpack.c.h.b16 %v417
        %v533 = vunpack.c.l.b16 %v418
        %v534 = vunpack.c.h.b16 %v418
        %v535 = vunpack.c.l.b16 %v419
        %v536 = vunpack.c.h.b16 %v419
        %v537 = vunpack.c.l.b16 %v420
        %v538 = vunpack.c.h.b16 %v420
        %v539 = vpack.c.b16 %v479, %v475
        %v540 = vpack.c.b16 %v480, %v476
        %v541 = vpack.c.b16 %v481, %v477
        %v542 = vpack.c.b16 %v482, %v478
        %v543 = vpack.c.b16 %v487, %v483
        %v544 = vpack.c.b16 %v488, %v484
        %v545 = vpack.c.b16 %v489, %v485
        %v546 = vpack.c.b16 %v490, %v486
        %v547 = vpack.c.b16 %v495, %v491
        %v548 = vpack.c.b16 %v496, %v492
        %v549 = vpack.c.b16 %v497, %v493
        %v550 = vpack.c.b16 %v498, %v494
        %v551 = vpack.c.b16 %v503, %v499
        %v552 = vpack.c.b16 %v504, %v500
        %v553 = vpack.c.b16 %v505, %v501
        %v554 = vpack.c.b16 %v506, %v502
        %v555 = vpack.c.b16 %v511, %v507
        %v556 = vpack.c.b16 %v512, %v508
        %v557 = vpack.c.b16 %v513, %v509
        %v558 = vpack.c.b16 %v514, %v510
        %v559 = vpack.c.b16 %v519, %v515
        %v560 = vpack.c.b16 %v520, %v516
        %v561 = vpack.c.b16 %v521, %v517
        %v562 = vpack.c.b16 %v522, %v518
        %v563 = vpack.c.b16 %v527, %v523
        %v564 = vpack.c.b16 %v528, %v524
        %v565 = vpack.c.b16 %v529, %v525
        %v566 = vpack.c.b16 %v530, %v526
        %v567 = vpack.c.b16 %v535, %v531
        %v568 = vpack.c.b16 %v536, %v532
        %v569 = vpack.c.b16 %v537, %v533
        %v570 = vpack.c.b16 %v538, %v534
        %603 = vmatprep.subr.bf16.mxu0 %v568
        %604 = vmatpush1.bf16.msra.mxu0 %v567
        %605 = vmatprep.subr.bf16.mxu0 %v564
        %606 = vmatpush1.bf16.msra.mxu0 %v563
        %607 = vmatprep.subr.bf16.mxu0 %v560
        %608 = vmatpush1.bf16.msra.mxu0 %v559
        %609 = vmatprep.subr.bf16.mxu0 %v556
        %610 = vmatpush1.bf16.msra.mxu0 %v555
        %611 = vmatprep.subr.bf16.mxu0 %v552
        %612 = vmatpush1.bf16.msra.mxu0 %v551
        %613 = vmatprep.subr.bf16.mxu0 %v548
        %614 = vmatpush1.bf16.msra.mxu0 %v547
        %615 = vmatprep.subr.bf16.mxu0 %v544
        %616 = vmatpush1.bf16.msra.mxu0 %v543
        %617 = vmatprep.subr.bf16.mxu0 %v540
        %618 = vmatpush1.bf16.msra.mxu0 %v539
        %619 = vmatprep.subr.bf16.mxu0 0
        %620 = vmatpush2.bf16.msra.mxu0 0
        %621 = vmatprep.subr.bf16.mxu0 0
        %622 = vmatpush2.bf16.msra.mxu0 0
        %623 = vmatprep.subr.bf16.mxu0 0
        %624 = vmatpush2.bf16.msra.mxu0 0
        %625 = vmatprep.subr.bf16.mxu0 0
        %626 = vmatpush2.bf16.msra.mxu0 0
        %627 = vmatprep.subr.bf16.mxu0 0
        %628 = vmatpush2.bf16.msra.mxu0 0
        %629 = vmatprep.subr.bf16.mxu0 0
        %630 = vmatpush2.bf16.msra.mxu0 0
        %631 = vmatprep.subr.bf16.mxu0 0
        %632 = vmatpush2.bf16.msra.mxu0 0
        %633 = vmatprep.subr.bf16.mxu0 0
        %634 = vmatpush2.bf16.msra.mxu0 0
        %635 = vmatprep.mubr.bf16.mxu0 0
        %636 = vmatmul.mubr.bf16.gmra.mxu0 %v385
        %v637 = vpop.f32.mrf.mxu0
        %v638 = vadd.f32 %v426, %v637
        %v639 = vpop.f32.mrf.mxu0
        %v640 = vadd.f32 %v430, %v639
        %v641 = vpop.f32.mrf.mxu0
        %v642 = vadd.f32 %v426, %v641
        %v643 = vpop.f32.mrf.mxu0
        %v644 = vadd.f32 %v430, %v643
        %645 = vmatprep.mubr.bf16.mxu0 0
        %646 = vmatmul.mubr.bf16.gmra.mxu0 %v386
        %v647 = vpop.f32.mrf.mxu0
        %v648 = vadd.f32 %v426, %v647
        %v649 = vpop.f32.mrf.mxu0
        %v650 = vadd.f32 %v430, %v649
        %v651 = vpop.f32.mrf.mxu0
        %v652 = vadd.f32 %v426, %v651
        %v653 = vpop.f32.mrf.mxu0
        %v654 = vadd.f32 %v430, %v653
        %655 = vmatprep.mubr.bf16.mxu0 0
        %656 = vmatmul.mubr.bf16.gmra.mxu0 %v387
        %v657 = vpop.f32.mrf.mxu0
        %v658 = vadd.f32 %v426, %v657
        %v659 = vpop.f32.mrf.mxu0
        %v660 = vadd.f32 %v430, %v659
        %v661 = vpop.f32.mrf.mxu0
        %v662 = vadd.f32 %v426, %v661
        %v663 = vpop.f32.mrf.mxu0
        %v664 = vadd.f32 %v430, %v663
        %665 = vmatprep.mubr.bf16.mxu0 0
        %666 = vmatmul.mubr.bf16.gmra.mxu0 %v388
        %v667 = vpop.f32.mrf.mxu0
        %v668 = vadd.f32 %v426, %v667
        %v669 = vpop.f32.mrf.mxu0
        %v670 = vadd.f32 %v430, %v669
        %v671 = vpop.f32.mrf.mxu0
        %v672 = vadd.f32 %v426, %v671
        %v673 = vpop.f32.mrf.mxu0
        %v674 = vadd.f32 %v430, %v673
        %675 = vdwg.mxu0
        %676 = vmatprep.subr.bf16.mxu0 %v570
        %677 = vmatpush1.bf16.msra.mxu0 %v569
        %678 = vmatprep.subr.bf16.mxu0 %v566
        %679 = vmatpush1.bf16.msra.mxu0 %v565
        %680 = vmatprep.subr.bf16.mxu0 %v562
        %681 = vmatpush1.bf16.msra.mxu0 %v561
        %682 = vmatprep.subr.bf16.mxu0 %v558
        %683 = vmatpush1.bf16.msra.mxu0 %v557
        %684 = vmatprep.subr.bf16.mxu0 %v554
        %685 = vmatpush1.bf16.msra.mxu0 %v553
        %686 = vmatprep.subr.bf16.mxu0 %v550
        %687 = vmatpush1.bf16.msra.mxu0 %v549
        %688 = vmatprep.subr.bf16.mxu0 %v546
        %689 = vmatpush1.bf16.msra.mxu0 %v545
        %690 = vmatprep.subr.bf16.mxu0 %v542
        %691 = vmatpush1.bf16.msra.mxu0 %v541
        %692 = vmatprep.subr.bf16.mxu0 0
        %693 = vmatpush2.bf16.msra.mxu0 0
        %694 = vmatprep.subr.bf16.mxu0 0
        %695 = vmatpush2.bf16.msra.mxu0 0
        %696 = vmatprep.subr.bf16.mxu0 0
        %697 = vmatpush2.bf16.msra.mxu0 0
        %698 = vmatprep.subr.bf16.mxu0 0
        %699 = vmatpush2.bf16.msra.mxu0 0
        %700 = vmatprep.subr.bf16.mxu0 0
        %701 = vmatpush2.bf16.msra.mxu0 0
        %702 = vmatprep.subr.bf16.mxu0 0
        %703 = vmatpush2.bf16.msra.mxu0 0
        %704 = vmatprep.subr.bf16.mxu0 0
        %705 = vmatpush2.bf16.msra.mxu0 0
        %706 = vmatprep.subr.bf16.mxu0 0
        %707 = vmatpush2.bf16.msra.mxu0 0
        %708 = vmatprep.mubr.bf16.mxu0 0
        %709 = vmatmul.mubr.bf16.gmra.mxu0 %v385
        %v710 = vpop.f32.mrf.mxu0
        %v711 = vadd.f32 %v434, %v710
        %v712 = vpop.f32.mrf.mxu0
        %v713 = vadd.f32 %v438, %v712
        %v714 = vpop.f32.mrf.mxu0
        %v715 = vadd.f32 %v434, %v714
        %v716 = vpop.f32.mrf.mxu0
        %v717 = vadd.f32 %v438, %v716
        %718 = vmatprep.mubr.bf16.mxu0 0
        %719 = vmatmul.mubr.bf16.gmra.mxu0 %v386
        %v720 = vpop.f32.mrf.mxu0
        %v721 = vadd.f32 %v434, %v720
        %v722 = vpop.f32.mrf.mxu0
        %v723 = vadd.f32 %v438, %v722
        %v724 = vpop.f32.mrf.mxu0
        %v725 = vadd.f32 %v434, %v724
        %v726 = vpop.f32.mrf.mxu0
        %v727 = vadd.f32 %v438, %v726
        %728 = vmatprep.mubr.bf16.mxu0 0
        %729 = vmatmul.mubr.bf16.gmra.mxu0 %v387
        %v730 = vpop.f32.mrf.mxu0
        %v731 = vadd.f32 %v434, %v730
        %v732 = vpop.f32.mrf.mxu0
        %v733 = vadd.f32 %v438, %v732
        %v734 = vpop.f32.mrf.mxu0
        %v735 = vadd.f32 %v434, %v734
        %v736 = vpop.f32.mrf.mxu0
        %v737 = vadd.f32 %v438, %v736
        %738 = vmatprep.mubr.bf16.mxu0 0
        %739 = vmatmul.mubr.bf16.gmra.mxu0 %v388
        %v740 = vpop.f32.mrf.mxu0
        %v741 = vadd.f32 %v434, %v740
        %v742 = vpop.f32.mrf.mxu0
        %v743 = vadd.f32 %v438, %v742
        %v744 = vpop.f32.mrf.mxu0
        %v745 = vadd.f32 %v434, %v744
        %v746 = vpop.f32.mrf.mxu0
        %v747 = vadd.f32 %v438, %v746
        %748 = vdwg.mxu0
        %v749 = vmax.f32 %v638, 0.0
        %v750 = vmax.f32 %v640, 0.0
        %v751 = vmax.f32 %v711, 0.0
        %v752 = vmax.f32 %v713, 0.0
        %v753 = vmax.f32 %v642, 0.0
        %v754 = vmax.f32 %v644, 0.0
        %v755 = vmax.f32 %v715, 0.0
        %v756 = vmax.f32 %v717, 0.0
        %v757 = vmax.f32 %v648, 0.0
        %v758 = vmax.f32 %v650, 0.0
        %v759 = vmax.f32 %v721, 0.0
        %v760 = vmax.f32 %v723, 0.0
        %v761 = vmax.f32 %v652, 0.0
        %v762 = vmax.f32 %v654, 0.0
        %v763 = vmax.f32 %v725, 0.0
        %v764 = vmax.f32 %v727, 0.0
        %v765 = vmax.f32 %v658, 0.0
        %v766 = vmax.f32 %v660, 0.0
        %v767 = vmax.f32 %v731, 0.0
        %v768 = vmax.f32 %v733, 0.0
        %v769 = vmax.f32 %v662, 0.0
        %v770 = vmax.f32 %v664, 0.0
        %v771 = vmax.f32 %v735, 0.0
        %v772 = vmax.f32 %v737, 0.0
        %v773 = vmax.f32 %v668, 0.0
        %v774 = vmax.f32 %v670, 0.0
        %v775 = vmax.f32 %v741, 0.0
        %v776 = vmax.f32 %v743, 0.0
        %v777 = vmax.f32 %v672, 0.0
        %v778 = vmax.f32 %v674, 0.0
        %v779 = vmax.f32 %v745, 0.0
        %v780 = vmax.f32 %v747, 0.0
        %v781 = vpack.c.bf16 %v753, %v749
        %v782 = vpack.c.bf16 %v754, %v750
        %v783 = vpack.c.bf16 %v755, %v751
        %v784 = vpack.c.bf16 %v756, %v752
        %v785 = vpack.c.bf16 %v761, %v757
        %v786 = vpack.c.bf16 %v762, %v758
        %v787 = vpack.c.bf16 %v763, %v759
        %v788 = vpack.c.bf16 %v764, %v760
        %v789 = vpack.c.bf16 %v769, %v765
        %v790 = vpack.c.bf16 %v770, %v766
        %v791 = vpack.c.bf16 %v771, %v767
        %v792 = vpack.c.bf16 %v772, %v768
        %v793 = vpack.c.bf16 %v777, %v773
        %v794 = vpack.c.bf16 %v778, %v774
        %v795 = vpack.c.bf16 %v779, %v775
        %v796 = vpack.c.bf16 %v780, %v776
        %v797 = vld [vmem:[#allocation8] sm:$0xf]
        %v798 = vld [vmem:[#allocation8 + $0x4] sm:$0xf]
        %v799 = vld [vmem:[#allocation8 + $0x8] sm:$0xf]
        %v800 = vld [vmem:[#allocation8 + $0xc] sm:$0xf]
        %v801 = vld [vmem:[#allocation8 + $0x10] sm:$0xf]
        %v802 = vld [vmem:[#allocation8 + $0x14] sm:$0xf]
        %v803 = vld [vmem:[#allocation8 + $0x18] sm:$0xf]
        %v804 = vld [vmem:[#allocation8 + $0x1c] sm:$0xf]
        %v805 = vld [vmem:[#allocation8 + $0x20] sm:$0xf]
        %v806 = vld [vmem:[#allocation8 + $0x24] sm:$0xf]
        %v807 = vld [vmem:[#allocation8 + $0x28] sm:$0xf]
        %v808 = vld [vmem:[#allocation8 + $0x2c] sm:$0xf]
        %v809 = vld [vmem:[#allocation8 + $0x30] sm:$0xf]
        %v810 = vld [vmem:[#allocation8 + $0x34] sm:$0xf]
        %v811 = vld [vmem:[#allocation8 + $0x38] sm:$0xf]
        %v812 = vld [vmem:[#allocation8 + $0x3c] sm:$0xf]
        %v813 = vld [vmem:[#allocation8 + $0x40] sm:$0xf]
        %v814 = vld [vmem:[#allocation8 + $0x44] sm:$0xf]
        %v815 = vld [vmem:[#allocation8 + $0x48] sm:$0xf]
        %v816 = vld [vmem:[#allocation8 + $0x4c] sm:$0xf]
        %v817 = vld [vmem:[#allocation8 + $0x50] sm:$0xf]
        %v818 = vld [vmem:[#allocation8 + $0x54] sm:$0xf]
        %v819 = vld [vmem:[#allocation8 + $0x58] sm:$0xf]
        %v820 = vld [vmem:[#allocation8 + $0x5c] sm:$0xf]
        %v821 = vld [vmem:[#allocation8 + $0x60] sm:$0xf]
        %v822 = vld [vmem:[#allocation8 + $0x64] sm:$0xf]
        %v823 = vld [vmem:[#allocation8 + $0x68] sm:$0xf]
        %v824 = vld [vmem:[#allocation8 + $0x6c] sm:$0xf]
        %v825 = vld [vmem:[#allocation8 + $0x70] sm:$0xf]
        %v826 = vld [vmem:[#allocation8 + $0x74] sm:$0xf]
        %v827 = vld [vmem:[#allocation8 + $0x78] sm:$0xf]
        %v828 = vld [vmem:[#allocation8 + $0x7c] sm:$0xf]
        %v829 = vld [vmem:[#allocation8 + $0x80] sm:$0xf]
        %v830 = vld [vmem:[#allocation8 + $0x84] sm:$0xf]
        %v831 = vld [vmem:[#allocation8 + $0x88] sm:$0xf]
        %v832 = vld [vmem:[#allocation8 + $0x8c] sm:$0xf]
        %v833 = vld [vmem:[#allocation8 + $0x90] sm:$0xf]
        %v834 = vld [vmem:[#allocation8 + $0x94] sm:$0xf]
        %v835 = vld [vmem:[#allocation8 + $0x98] sm:$0xf]
        %v836 = vld [vmem:[#allocation8 + $0x9c] sm:$0xf]
        %v837 = vld [vmem:[#allocation8 + $0xa0] sm:$0xf]
        %v838 = vld [vmem:[#allocation8 + $0xa4] sm:$0xf]
        %v839 = vld [vmem:[#allocation8 + $0xa8] sm:$0xf]
        %v840 = vld [vmem:[#allocation8 + $0xac] sm:$0xf]
        %v841 = vld [vmem:[#allocation8 + $0xb0] sm:$0xf]
        %v842 = vld [vmem:[#allocation8 + $0xb4] sm:$0xf]
        %v843 = vld [vmem:[#allocation8 + $0xb8] sm:$0xf]
        %v844 = vld [vmem:[#allocation8 + $0xbc] sm:$0xf]
        %v845 = vld [vmem:[#allocation8 + $0xc0] sm:$0xf]
        %v846 = vld [vmem:[#allocation8 + $0xc4] sm:$0xf]
        %v847 = vld [vmem:[#allocation8 + $0xc8] sm:$0xf]
        %v848 = vld [vmem:[#allocation8 + $0xcc] sm:$0xf]
        %v849 = vld [vmem:[#allocation8 + $0xd0] sm:$0xf]
        %v850 = vld [vmem:[#allocation8 + $0xd4] sm:$0xf]
        %v851 = vld [vmem:[#allocation8 + $0xd8] sm:$0xf]
        %v852 = vld [vmem:[#allocation8 + $0xdc] sm:$0xf]
        %v853 = vld [vmem:[#allocation8 + $0xe0] sm:$0xf]
        %v854 = vld [vmem:[#allocation8 + $0xe4] sm:$0xf]
        %v855 = vld [vmem:[#allocation8 + $0xe8] sm:$0xf]
        %v856 = vld [vmem:[#allocation8 + $0xec] sm:$0xf]
        %v857 = vld [vmem:[#allocation8 + $0xf0] sm:$0xf]
        %v858 = vld [vmem:[#allocation8 + $0xf4] sm:$0xf]
        %v859 = vld [vmem:[#allocation8 + $0xf8] sm:$0xf]
        %v860 = vld [vmem:[#allocation8 + $0xfc] sm:$0xf]
        %v861 = vld [vmem:[%s4] sm:$0x1]
        %v863 = vlaneseq
        %v864 = vshrl.u32 %v863, 7
        %v865 = vsub.s32 0, %v864
        %v866 = vrot.slane %v861, %v865
        %v932 = vunpack.c.l.b16 %v797
        %v933 = vunpack.c.l.b16 %v798
        %v934 = vunpack.c.l.b16 %v799
        %v935 = vunpack.c.l.b16 %v800
        %v936 = vunpack.c.l.b16 %v801
        %v937 = vunpack.c.l.b16 %v802
        %v938 = vunpack.c.l.b16 %v803
        %v939 = vunpack.c.l.b16 %v804
        %v940 = vunpack.c.l.b16 %v805
        %v941 = vunpack.c.l.b16 %v806
        %v942 = vunpack.c.l.b16 %v807
        %v943 = vunpack.c.l.b16 %v808
        %v944 = vunpack.c.l.b16 %v809
        %v945 = vunpack.c.l.b16 %v810
        %v946 = vunpack.c.l.b16 %v811
        %v947 = vunpack.c.l.b16 %v812
        %v948 = vunpack.c.l.b16 %v813
        %v949 = vunpack.c.l.b16 %v814
        %v950 = vunpack.c.l.b16 %v815
        %v951 = vunpack.c.l.b16 %v816
        %v952 = vunpack.c.l.b16 %v817
        %v953 = vunpack.c.l.b16 %v818
        %v954 = vunpack.c.l.b16 %v819
        %v955 = vunpack.c.l.b16 %v820
        %v956 = vunpack.c.l.b16 %v821
        %v957 = vunpack.c.l.b16 %v822
        %v958 = vunpack.c.l.b16 %v823
        %v959 = vunpack.c.l.b16 %v824
        %v960 = vunpack.c.l.b16 %v825
        %v961 = vunpack.c.l.b16 %v826
        %v962 = vunpack.c.l.b16 %v827
        %v963 = vunpack.c.l.b16 %v828
        %v964 = vunpack.c.l.b16 %v829
        %v965 = vunpack.c.l.b16 %v830
        %v966 = vunpack.c.l.b16 %v831
        %v967 = vunpack.c.l.b16 %v832
        %v968 = vunpack.c.l.b16 %v833
        %v969 = vunpack.c.l.b16 %v834
        %v970 = vunpack.c.l.b16 %v835
        %v971 = vunpack.c.l.b16 %v836
        %v972 = vunpack.c.l.b16 %v837
        %v973 = vunpack.c.l.b16 %v838
        %v974 = vunpack.c.l.b16 %v839
        %v975 = vunpack.c.l.b16 %v840
        %v976 = vunpack.c.l.b16 %v841
        %v977 = vunpack.c.l.b16 %v842
        %v978 = vunpack.c.l.b16 %v843
        %v979 = vunpack.c.l.b16 %v844
        %v980 = vunpack.c.l.b16 %v845
        %v981 = vunpack.c.l.b16 %v846
        %v982 = vunpack.c.l.b16 %v847
        %v983 = vunpack.c.l.b16 %v848
        %v984 = vunpack.c.l.b16 %v849
        %v985 = vunpack.c.l.b16 %v850
        %v986 = vunpack.c.l.b16 %v851
        %v987 = vunpack.c.l.b16 %v852
        %v988 = vunpack.c.l.b16 %v853
        %v989 = vunpack.c.l.b16 %v854
        %v990 = vunpack.c.l.b16 %v855
        %v991 = vunpack.c.l.b16 %v856
        %v992 = vunpack.c.l.b16 %v857
        %v993 = vunpack.c.l.b16 %v858
        %v994 = vunpack.c.l.b16 %v859
        %v995 = vunpack.c.l.b16 %v860
        %v996 = vpack.c.b16 %v933, %v932
        %v997 = vpack.c.b16 %v935, %v934
        %v998 = vpack.c.b16 %v937, %v936
        %v999 = vpack.c.b16 %v939, %v938
        %v1000 = vpack.c.b16 %v941, %v940
        %v1001 = vpack.c.b16 %v943, %v942
        %v1002 = vpack.c.b16 %v945, %v944
        %v1003 = vpack.c.b16 %v947, %v946
        %v1004 = vpack.c.b16 %v949, %v948
        %v1005 = vpack.c.b16 %v951, %v950
        %v1006 = vpack.c.b16 %v953, %v952
        %v1007 = vpack.c.b16 %v955, %v954
        %v1008 = vpack.c.b16 %v957, %v956
        %v1009 = vpack.c.b16 %v959, %v958
        %v1010 = vpack.c.b16 %v961, %v960
        %v1011 = vpack.c.b16 %v963, %v962
        %v1012 = vpack.c.b16 %v965, %v964
        %v1013 = vpack.c.b16 %v967, %v966
        %v1014 = vpack.c.b16 %v969, %v968
        %v1015 = vpack.c.b16 %v971, %v970
        %v1016 = vpack.c.b16 %v973, %v972
        %v1017 = vpack.c.b16 %v975, %v974
        %v1018 = vpack.c.b16 %v977, %v976
        %v1019 = vpack.c.b16 %v979, %v978
        %v1020 = vpack.c.b16 %v981, %v980
        %v1021 = vpack.c.b16 %v983, %v982
        %v1022 = vpack.c.b16 %v985, %v984
        %v1023 = vpack.c.b16 %v987, %v986
        %v1024 = vpack.c.b16 %v989, %v988
        %v1025 = vpack.c.b16 %v991, %v990
        %v1026 = vpack.c.b16 %v993, %v992
        %v1027 = vpack.c.b16 %v995, %v994
        %1060 = vmatprep.subr.bf16.mxu0 0
        %1061 = vmatpush1.bf16.msra.mxu0 %v1003
        %1062 = vmatprep.subr.bf16.mxu0 0
        %1063 = vmatpush1.bf16.msra.mxu0 %v1002
        %1064 = vmatprep.subr.bf16.mxu0 0
        %1065 = vmatpush1.bf16.msra.mxu0 %v1001
        %1066 = vmatprep.subr.bf16.mxu0 0
        %1067 = vmatpush1.bf16.msra.mxu0 %v1000
        %1068 = vmatprep.subr.bf16.mxu0 0
        %1069 = vmatpush1.bf16.msra.mxu0 %v999
        %1070 = vmatprep.subr.bf16.mxu0 0
        %1071 = vmatpush1.bf16.msra.mxu0 %v998
        %1072 = vmatprep.subr.bf16.mxu0 0
        %1073 = vmatpush1.bf16.msra.mxu0 %v997
        %1074 = vmatprep.subr.bf16.mxu0 0
        %1075 = vmatpush1.bf16.msra.mxu0 %v996
        %1076 = vmatprep.subr.bf16.mxu0 0
        %1077 = vmatpush2.bf16.msra.mxu0 %v1011
        %1078 = vmatprep.subr.bf16.mxu0 0
        %1079 = vmatpush2.bf16.msra.mxu0 %v1010
        %1080 = vmatprep.subr.bf16.mxu0 0
        %1081 = vmatpush2.bf16.msra.mxu0 %v1009
        %1082 = vmatprep.subr.bf16.mxu0 0
        %1083 = vmatpush2.bf16.msra.mxu0 %v1008
        %1084 = vmatprep.subr.bf16.mxu0 0
        %1085 = vmatpush2.bf16.msra.mxu0 %v1007
        %1086 = vmatprep.subr.bf16.mxu0 0
        %1087 = vmatpush2.bf16.msra.mxu0 %v1006
        %1088 = vmatprep.subr.bf16.mxu0 0
        %1089 = vmatpush2.bf16.msra.mxu0 %v1005
        %1090 = vmatprep.subr.bf16.mxu0 0
        %1091 = vmatpush2.bf16.msra.mxu0 %v1004
        %1092 = vmatprep.mubr.bf16.mxu0 %v782
        %1093 = vmatmul.mubr.bf16.gmra.mxu0 %v781
        %v1094 = vpop.f32.mrf.mxu0
        %v1095 = vadd.f32 %v866, %v1094
        %v1096 = vpop.f32.mrf.mxu0
        %v1097 = vpop.f32.mrf.mxu0
        %v1098 = vadd.f32 %v866, %v1097
        %v1099 = vpop.f32.mrf.mxu0
        %1100 = vmatprep.mubr.bf16.mxu0 %v786
        %1101 = vmatmul.mubr.bf16.gmra.mxu0 %v785
        %v1102 = vpop.f32.mrf.mxu0
        %v1103 = vadd.f32 %v866, %v1102
        %v1104 = vpop.f32.mrf.mxu0
        %v1105 = vpop.f32.mrf.mxu0
        %v1106 = vadd.f32 %v866, %v1105
        %v1107 = vpop.f32.mrf.mxu0
        %1108 = vmatprep.mubr.bf16.mxu0 %v790
        %1109 = vmatmul.mubr.bf16.gmra.mxu0 %v789
        %v1110 = vpop.f32.mrf.mxu0
        %v1111 = vadd.f32 %v866, %v1110
        %v1112 = vpop.f32.mrf.mxu0
        %v1113 = vpop.f32.mrf.mxu0
        %v1114 = vadd.f32 %v866, %v1113
        %v1115 = vpop.f32.mrf.mxu0
        %1116 = vmatprep.mubr.bf16.mxu0 %v794
        %1117 = vmatmul.mubr.bf16.gmra.mxu0 %v793
        %v1118 = vpop.f32.mrf.mxu0
        %v1119 = vadd.f32 %v866, %v1118
        %v1120 = vpop.f32.mrf.mxu0
        %v1121 = vpop.f32.mrf.mxu0
        %v1122 = vadd.f32 %v866, %v1121
        %v1123 = vpop.f32.mrf.mxu0
        %1124 = vdwg.mxu0
        %1125 = vmatprep.subr.bf16.mxu0 0
        %1126 = vmatpush1.bf16.msra.mxu0 %v1019
        %1127 = vmatprep.subr.bf16.mxu0 0
        %1128 = vmatpush1.bf16.msra.mxu0 %v1018
        %1129 = vmatprep.subr.bf16.mxu0 0
        %1130 = vmatpush1.bf16.msra.mxu0 %v1017
        %1131 = vmatprep.subr.bf16.mxu0 0
        %1132 = vmatpush1.bf16.msra.mxu0 %v1016
        %1133 = vmatprep.subr.bf16.mxu0 0
        %1134 = vmatpush1.bf16.msra.mxu0 %v1015
        %1135 = vmatprep.subr.bf16.mxu0 0
        %1136 = vmatpush1.bf16.msra.mxu0 %v1014
        %1137 = vmatprep.subr.bf16.mxu0 0
        %1138 = vmatpush1.bf16.msra.mxu0 %v1013
        %1139 = vmatprep.subr.bf16.mxu0 0
        %1140 = vmatpush1.bf16.msra.mxu0 %v1012
        %1141 = vmatprep.subr.bf16.mxu0 0
        %1142 = vmatpush2.bf16.msra.mxu0 %v1027
        %1143 = vmatprep.subr.bf16.mxu0 0
        %1144 = vmatpush2.bf16.msra.mxu0 %v1026
        %1145 = vmatprep.subr.bf16.mxu0 0
        %1146 = vmatpush2.bf16.msra.mxu0 %v1025
        %1147 = vmatprep.subr.bf16.mxu0 0
        %1148 = vmatpush2.bf16.msra.mxu0 %v1024
        %1149 = vmatprep.subr.bf16.mxu0 0
        %1150 = vmatpush2.bf16.msra.mxu0 %v1023
        %1151 = vmatprep.subr.bf16.mxu0 0
        %1152 = vmatpush2.bf16.msra.mxu0 %v1022
        %1153 = vmatprep.subr.bf16.mxu0 0
        %1154 = vmatpush2.bf16.msra.mxu0 %v1021
        %1155 = vmatprep.subr.bf16.mxu0 0
        %1156 = vmatpush2.bf16.msra.mxu0 %v1020
        %1157 = vmatprep.mubr.bf16.mxu0 %v784
        %1158 = vmatmul.mubr.bf16.gmra.mxu0 %v783
        %v1159 = vpop.f32.mrf.mxu0
        %v1160 = vadd.f32 %v1095, %v1159
        %v1161 = vpop.f32.mrf.mxu0
        %v1162 = vpop.f32.mrf.mxu0
        %v1163 = vadd.f32 %v1098, %v1162
        %v1164 = vpop.f32.mrf.mxu0
        %1165 = vmatprep.mubr.bf16.mxu0 %v788
        %1166 = vmatmul.mubr.bf16.gmra.mxu0 %v787
        %v1167 = vpop.f32.mrf.mxu0
        %v1168 = vadd.f32 %v1103, %v1167
        %v1169 = vpop.f32.mrf.mxu0
        %v1170 = vpop.f32.mrf.mxu0
        %v1171 = vadd.f32 %v1106, %v1170
        %v1172 = vpop.f32.mrf.mxu0
        %1173 = vmatprep.mubr.bf16.mxu0 %v792
        %1174 = vmatmul.mubr.bf16.gmra.mxu0 %v791
        %v1175 = vpop.f32.mrf.mxu0
        %v1176 = vadd.f32 %v1111, %v1175
        %v1177 = vpop.f32.mrf.mxu0
        %v1178 = vpop.f32.mrf.mxu0
        %v1179 = vadd.f32 %v1114, %v1178
        %v1180 = vpop.f32.mrf.mxu0
        %1181 = vmatprep.mubr.bf16.mxu0 %v796
        %1182 = vmatmul.mubr.bf16.gmra.mxu0 %v795
        %v1183 = vpop.f32.mrf.mxu0
        %v1184 = vadd.f32 %v1119, %v1183
        %v1185 = vpop.f32.mrf.mxu0
        %v1186 = vpop.f32.mrf.mxu0
        %v1187 = vadd.f32 %v1122, %v1186
        %v1188 = vpop.f32.mrf.mxu0
        %1189 = vdwg.mxu0
        %1190 = vst [vmem:[%s284] sm:$0xff] %v1160
        %1191 = vst [vmem:[%s284 + $0x8] sm:$0xff] %v1163
        %1192 = vst [vmem:[%s284 + $0x10] sm:$0xff] %v1168
        %1193 = vst [vmem:[%s284 + $0x18] sm:$0xff] %v1171
        %1194 = vst [vmem:[%s284 + $0x20] sm:$0xff] %v1176
        %1195 = vst [vmem:[%s284 + $0x28] sm:$0xff] %v1179
        %1196 = vst [vmem:[%s284 + $0x30] sm:$0xff] %v1184
        %1197 = vst [vmem:[%s284 + $0x38] sm:$0xff] %v1187
        %s1198 = sand.u32 %s142, 1
        %s1199 = scalar_lea.sflag [#allocation4], %s1198
        %s1200 = sand.u32 %s142, 1
        %s1201 = smul.addr %s1200, 64
        %s1202 = scalar_lea.vmem [#allocation10], %s1201
        // Predicated region
        $region57: #{tpu_custom_call.1} parent=39 // pred_check
          %p1203 = pneg %p152
        $region58: #{tpu_custom_call.1} parent=39 // pred_check_branch
          %1205 = sbr.rel (%p1203) target = $region60
        $region59: #{tpu_custom_call.1} parent=39 // pred_region
          %s1206 = smul.u32 8, %s24
          %s1208 = ssub.s32 1024, 1024
          %1209 = vsyncadd %s1199, %s1208
          %s1210 = smul.addr %s1206, 128
          %s1211 = scalar_lea.hbm %s5, %s1210
          %s1212 = sshll.u32 %s1202, 4
          %s1213 = int_to_ptr.vmem [resolvable:$true] %s1212
          %1218 = dma.vmem_to_hbm [thread:$0]  %s1213, 1024, %s1211, %s1199, 128, 128, 8
        $region60: #{tpu_custom_call.1} parent=39 // pred_fallthru
          _
      $region40: #{tpu_custom_call.1} parent=5 // pred_fallthru
        _
      %p1219 = scmp.le.s32.totalorder 2, %s19
      // Predicated region
      $region61: #{tpu_custom_call.1} parent=5 // pred_check
        %p1220 = pneg %p1219
      $region62: #{tpu_custom_call.1} parent=5 // pred_check_branch
        %1222 = sbr.rel (%p1220) target = $region64
      $region63: #{tpu_custom_call.1} parent=5 // pred_region
        %s1223 = ssub.s32 %s19, 2
        // Predicated region
        $region65: #{tpu_custom_call.1} parent=63 // pred_check
          %p1224 = pneg %p158
        $region66: #{tpu_custom_call.1} parent=63 // pred_check_branch
          %1226 = sbr.rel (%p1224) target = $region68
        $region67: #{tpu_custom_call.1} parent=63 // pred_region
          %s1227 = sand.u32 %s143, 1
          %s1228 = scalar_lea.sflag [#allocation4], %s1227
          %s1229 = sand.u32 %s143, 1
          %s1230 = smul.addr %s1229, 64
          %s1231 = scalar_lea.vmem [#allocation10], %s1230
          %1232 = dma.done %s1228, 1024
        $region68: #{tpu_custom_call.1} parent=63 // pred_fallthru
          _
      $region64: #{tpu_custom_call.1} parent=5 // pred_fallthru
        _
    $region6: #{tpu_custom_call.1} parent=1 // loop_footer
      %s23 = sadd.s32 1, %s19
    $region7: #{tpu_custom_call.1} parent=1 // loop_footer_branch
      %18 = sbr.rel target = $region3
    $region8: #{tpu_custom_call.1} parent=1 // loop_exit
      _
    %1233 = vsyncpa [#allocation3], 1
    %s1234 = scalar_lea.sflag [#allocation3], 1
    %1235 = vsyncpa %s1234, 1
    %1236 = vsyncpa [#allocation6], 1
    %1237 = vsyncpa [#allocation9], 1
    %1238 = vsyncpa [#allocation4], 1
    %s1239 = scalar_lea.sflag [#allocation4], 1
    %1240 = vsyncpa %s1239, 1

</llo_original>
